<compile_context>
chip_gen: v5e
topology: v5e:2x2
jax: 0.10.0
libtpu: 0.0.40
codegen_flags: <defaults>
</compile_context>

<pallas_src>
import math
from functools import partial

import jax
import jax.numpy as jnp
from jax import lax
from jax.experimental import pallas as pl
from jax.experimental.pallas import tpu as pltpu

BN_EPS = 1e-5
TM_ROWS = 1024          # output rows per grid step (multiple of 128); sweepable


def _round_up(x, m):
    return ((x + m - 1) // m) * m


# ---------------------------------------------------------------------------
# Pallas kernel: fused K-matmul conv + folded-BN bias + ReLU (all lane-dense)
# ---------------------------------------------------------------------------
def _conv_bn_relu_kernel(x_ref, w_ref, b_ref, o_ref, patch_ref, *, shifts, cin, tm):
    """o = relu( W @ patch + b ), patch built from statically shifted slices.

    x_ref     : (1, cin, win) bf16  halo window of the channels-first image.
    w_ref     : (cout, K)     bf16  BN-folded weight matrix, K = kh*kw*cin.
    b_ref     : (cout, 1)     f32   BN-folded bias.
    o_ref     : (cout, tm)    bf16  lane-dense output tile.
    patch_ref : (K, tm)       bf16  VMEM scratch im2col patch.
    """
    for t, sh in enumerate(shifts):                      # static unrolled taps
        patch_ref[t * cin:(t + 1) * cin, :] = x_ref[0, :, sh:sh + tm]
    acc = jnp.dot(w_ref[...], patch_ref[...], preferred_element_type=jnp.float32)
    o_ref[...] = jnp.maximum(acc + b_ref[...], 0.0).astype(o_ref.dtype)


# ---------------------------------------------------------------------------
# Parameter construction: fold BN + conv bias into the weights ONCE.
# ---------------------------------------------------------------------------
def init_conv_bn_block(key, in_channels, out_channels, kernel_size=3,
                       stride=1, padding=1):
    assert stride == 1, "Conv_bn_block is only used with stride=1 convs"
    k_w, k_b = jax.random.split(key)
    fan_in = in_channels * kernel_size * kernel_size
    bound = 1.0 / math.sqrt(fan_in)
    # PyTorch-style Conv2d init, weight layout (Cout, Cin, kh, kw)
    w = jax.random.uniform(k_w, (out_channels, in_channels, kernel_size, kernel_size),
                           jnp.float32, -bound, bound)
    b = jax.random.uniform(k_b, (out_channels,), jnp.float32, -bound, bound)

    # Eval-mode BatchNorm2d with default buffers / affine params.
    gamma = jnp.ones((out_channels,), jnp.float32)
    beta = jnp.zeros((out_channels,), jnp.float32)
    running_mean = jnp.zeros((out_channels,), jnp.float32)
    running_var = jnp.ones((out_channels,), jnp.float32)

    scale = gamma / jnp.sqrt(running_var + BN_EPS)
    w_folded = w * scale[:, None, None, None]
    b_folded = (b - running_mean) * scale + beta

    # (Cout, Cin, kh, kw) -> (Cout, kh, kw, Cin) -> (Cout, K).  Column index
    # k = (di*kw + dj)*cin + c matches the kernel's tap/patch ordering.
    K = kernel_size * kernel_size * in_channels
    w_mat = jnp.transpose(w_folded, (0, 2, 3, 1)).reshape(out_channels, K)

    return {
        "w_mat": w_mat.astype(jnp.bfloat16),
        "bias": b_folded.reshape(out_channels, 1).astype(jnp.float32),
        "kh": kernel_size, "kw": kernel_size, "padding": padding,
        "cin": in_channels, "cout": out_channels,
    }


# ---------------------------------------------------------------------------
# Forward pass (NCHW in / NCHW out like the PyTorch module; bf16 result)
# ---------------------------------------------------------------------------
def conv_bn_block_apply(params, x_nchw):
    kh, kw, p = params["kh"], params["kw"], params["padding"]
    cin, cout = params["cin"], params["cout"]
    B, C, H, W = x_nchw.shape
    assert C == cin
    Hp, Wp = H + 2 * p, W + 2 * p
    Ho, Wo = Hp - kh + 1, Wp - kw + 1                        # stride = 1

    # Channels-first flat layout: only major-dim transposes at the boundary.
    xp = jnp.pad(x_nchw.astype(jnp.float32), ((0, 0), (0, 0), (p, p), (p, p)))
    Mo = B * Hp * Wp
    x_cf = jnp.transpose(xp, (1, 0, 2, 3)).reshape(cin, Mo).astype(jnp.bfloat16)

    # Tap shifts on the flat spatial axis.  Taps near an image-row / batch
    # boundary read "across" into the next row / image; that is correct only
    # because those output positions fall in the discarded border (i>=Ho or
    # j>=Wo) sliced off below -- keep that slice in sync with `shifts`.
    shifts = tuple(di * Wp + dj for di in range(kh) for dj in range(kw))
    max_shift = max(shifts)
    K = kh * kw * cin

    tm = min(TM_ROWS, _round_up(Mo, 128))                    # lane-dense tile
    grid_m = (Mo + tm - 1) // tm
    rows_out = grid_m * tm
    win = _round_up(tm + max_shift, 128)                     # halo window width
    need = (grid_m - 1) * tm + win
    x_ext = jnp.pad(x_cf, ((0, 0), (0, need - Mo)))          # zero tail

    # Per-tile halo windows (grid_m, cin, win): VMEM per step is O(tm + halo)
    # and the windows pipeline through BlockSpec ("parallel" M axis).
    cols = (jnp.arange(grid_m) * tm)[:, None] + jnp.arange(win)[None, :]
    x_win = jnp.transpose(x_ext[:, cols], (1, 0, 2))         # (grid_m, cin, win)

    est_vmem = (2 * cin * win * 2 + 2 * cout * tm * 2 + K * cout * 2
                + cout * 4 + K * tm * 2)
    bytes_accessed = x_win.size * 2 + K * cout * 2 + cout * 4 + cout * rows_out * 2

    out_cf = pl.pallas_call(
        partial(_conv_bn_relu_kernel, shifts=shifts, cin=cin, tm=tm),
        out_shape=jax.ShapeDtypeStruct((cout, rows_out), jnp.bfloat16),
        grid=(grid_m,),
        in_specs=[
            pl.BlockSpec((1, cin, win), lambda i: (i, 0, 0)),   # halo window
            pl.BlockSpec((cout, K), lambda i: (0, 0)),          # weights (once)
            pl.BlockSpec((cout, 1), lambda i: (0, 0)),          # bias (once)
        ],
        out_specs=pl.BlockSpec((cout, tm), lambda i: (0, i)),
        scratch_shapes=[pltpu.VMEM((K, tm), jnp.bfloat16)],
        compiler_params=pltpu.CompilerParams(
            dimension_semantics=("parallel",),
            vmem_limit_bytes=int(min(64 * 2**20, max(16 * 2**20, 4 * est_vmem)))),
        cost_estimate=pl.CostEstimate(
            flops=2 * K * cout * rows_out, transcendentals=0,
            bytes_accessed=int(bytes_accessed)),
    )(x_win, params["w_mat"], params["bias"])

    # (cout, rows) -> (cout, B, Hp, Wp) -> drop padded border -> NCHW.
    out = out_cf[:, :Mo].reshape(cout, B, Hp, Wp)[:, :, :Ho, :Wo]
    # NOTE: output stays bf16 (downstream blocks re-cast to bf16 anyway).
    return jnp.transpose(out, (1, 0, 2, 3))


# ---------------------------------------------------------------------------
# Pure-JAX reference (same bf16-rounded folded weights) for a sanity check.
# ---------------------------------------------------------------------------
def conv_bn_block_reference(params, x_nchw):
    kh, kw, p = params["kh"], params["kw"], params["padding"]
    cin, cout = params["cin"], params["cout"]
    x = x_nchw.astype(jnp.float32).astype(jnp.bfloat16).astype(jnp.float32)
    w_oihw = (params["w_mat"].astype(jnp.float32)
              .reshape(cout, kh, kw, cin).transpose(0, 3, 1, 2))
    y = lax.conv_general_dilated(
        x, w_oihw, window_strides=(1, 1), padding=((p, p), (p, p)),
        dimension_numbers=("NCHW", "OIHW", "NCHW"),
        precision=lax.Precision.HIGHEST)
    y = jnp.maximum(y + params["bias"].reshape(1, cout, 1, 1), 0.0)
    return y


# ---------------------------------------------------------------------------
if __name__ == "__main__":
    B, C_IN, H, W = 2, 4, 16, 16
    C_OUT = 32

    key = jax.random.PRNGKey(0)
    k_x, k_p = jax.random.split(key)
    x = jax.random.normal(k_x, (B, C_IN, H, W), jnp.float32)
    params = init_conv_bn_block(k_p, C_IN, C_OUT, kernel_size=3, padding=1)

    fwd = jax.jit(lambda inp: conv_bn_block_apply(params, inp))
    out = fwd(x)
    jax.block_until_ready(out)

    assert out.shape == (B, C_OUT, H, W), out.shape
    assert bool(jnp.all(out >= 0.0))                      # ReLU output

    ref = conv_bn_block_reference(params, x)
    jax.block_until_ready(ref)
    max_err = float(jnp.max(jnp.abs(out.astype(jnp.float32) - ref)))
    assert max_err < 3e-2, f"max |pallas - reference| = {max_err}"

    print("KERNEL_OK")
</pallas_src>

<mosaic_0001>
module attributes {stable_mosaic.version = 11 : i64} {
  func.func @_conv_bn_relu_kernel(%arg0: i32, %arg1: memref<1x4x896xbf16, #tpu.memory_space<vmem>>, %arg2: memref<32x36xbf16, #tpu.memory_space<vmem>>, %arg3: memref<32x1xf32, #tpu.memory_space<vmem>>, %arg4: memref<32x768xbf16, #tpu.memory_space<vmem>>, %arg5: memref<36x768xbf16, #tpu.memory_space<vmem>>) attributes {dimension_semantics = [#tpu.dimension_semantics<parallel>], iteration_bounds = array<i64: 1>, scalar_prefetch = 0 : i64, scratch_operands = 1 : i64, tpu.core_type = #tpu.core_type<tc>, window_params = [{transform_indices = @transform_0, window_bounds = array<i64: 1, 4, 896>}, {pipeline_mode = #tpu.pipeline_mode<synchronous>, transform_indices = @transform_1, window_bounds = array<i64: 32, 36>}, {pipeline_mode = #tpu.pipeline_mode<synchronous>, transform_indices = @transform_2, window_bounds = array<i64: 32, 1>}, {transform_indices = @transform_3, window_bounds = array<i64: 32, 768>}]} {
    %c0 = arith.constant 0 : index
    %c0_0 = arith.constant 0 : index
    %c0_1 = arith.constant 0 : index
    %0 = vector.load %arg1[%c0, %c0_0, %c0_1] : memref<1x4x896xbf16, #tpu.memory_space<vmem>>, vector<1x4x768xbf16>
    %1 = vector.shape_cast %0 : vector<1x4x768xbf16> to vector<4x768xbf16>
    %c0_2 = arith.constant 0 : index
    %c0_3 = arith.constant 0 : index
    %2 = vector.load %arg5[%c0_2, %c0_3] : memref<36x768xbf16, #tpu.memory_space<vmem>>, vector<4x768xbf16>
    tpu.vector_store %arg5[%c0_2, %c0_3], %1 {strides = array<i32>} : memref<36x768xbf16, #tpu.memory_space<vmem>>, vector<4x768xbf16>,
    %c0_4 = arith.constant 0 : index
    %c0_5 = arith.constant 0 : index
    %c1 = arith.constant 1 : index
    %3 = vector.load %arg1[%c0_4, %c0_5, %c1] : memref<1x4x896xbf16, #tpu.memory_space<vmem>>, vector<1x4x768xbf16>
    %4 = vector.shape_cast %3 : vector<1x4x768xbf16> to vector<4x768xbf16>
    %c4 = arith.constant 4 : index
    %c0_6 = arith.constant 0 : index
    %5 = vector.load %arg5[%c4, %c0_6] : memref<36x768xbf16, #tpu.memory_space<vmem>>, vector<4x768xbf16>
    tpu.vector_store %arg5[%c4, %c0_6], %4 {strides = array<i32>} : memref<36x768xbf16, #tpu.memory_space<vmem>>, vector<4x768xbf16>,
    %c0_7 = arith.constant 0 : index
    %c0_8 = arith.constant 0 : index
    %c2 = arith.constant 2 : index
    %6 = vector.load %arg1[%c0_7, %c0_8, %c2] : memref<1x4x896xbf16, #tpu.memory_space<vmem>>, vector<1x4x768xbf16>
    %7 = vector.shape_cast %6 : vector<1x4x768xbf16> to vector<4x768xbf16>
    %c8 = arith.constant 8 : index
    %c0_9 = arith.constant 0 : index
    %8 = vector.load %arg5[%c8, %c0_9] : memref<36x768xbf16, #tpu.memory_space<vmem>>, vector<4x768xbf16>
    tpu.vector_store %arg5[%c8, %c0_9], %7 {strides = array<i32>} : memref<36x768xbf16, #tpu.memory_space<vmem>>, vector<4x768xbf16>,
    %c0_10 = arith.constant 0 : index
    %c0_11 = arith.constant 0 : index
    %c18 = arith.constant 18 : index
    %9 = vector.load %arg1[%c0_10, %c0_11, %c18] : memref<1x4x896xbf16, #tpu.memory_space<vmem>>, vector<1x4x768xbf16>
    %10 = vector.shape_cast %9 : vector<1x4x768xbf16> to vector<4x768xbf16>
    %c12 = arith.constant 12 : index
    %c0_12 = arith.constant 0 : index
    %11 = vector.load %arg5[%c12, %c0_12] : memref<36x768xbf16, #tpu.memory_space<vmem>>, vector<4x768xbf16>
    tpu.vector_store %arg5[%c12, %c0_12], %10 {strides = array<i32>} : memref<36x768xbf16, #tpu.memory_space<vmem>>, vector<4x768xbf16>,
    %c0_13 = arith.constant 0 : index
    %c0_14 = arith.constant 0 : index
    %c19 = arith.constant 19 : index
    %12 = vector.load %arg1[%c0_13, %c0_14, %c19] : memref<1x4x896xbf16, #tpu.memory_space<vmem>>, vector<1x4x768xbf16>
    %13 = vector.shape_cast %12 : vector<1x4x768xbf16> to vector<4x768xbf16>
    %c16 = arith.constant 16 : index
    %c0_15 = arith.constant 0 : index
    %14 = vector.load %arg5[%c16, %c0_15] : memref<36x768xbf16, #tpu.memory_space<vmem>>, vector<4x768xbf16>
    tpu.vector_store %arg5[%c16, %c0_15], %13 {strides = array<i32>} : memref<36x768xbf16, #tpu.memory_space<vmem>>, vector<4x768xbf16>,
    %c0_16 = arith.constant 0 : index
    %c0_17 = arith.constant 0 : index
    %c20 = arith.constant 20 : index
    %15 = vector.load %arg1[%c0_16, %c0_17, %c20] : memref<1x4x896xbf16, #tpu.memory_space<vmem>>, vector<1x4x768xbf16>
    %16 = vector.shape_cast %15 : vector<1x4x768xbf16> to vector<4x768xbf16>
    %c20_18 = arith.constant 20 : index
    %c0_19 = arith.constant 0 : index
    %17 = vector.load %arg5[%c20_18, %c0_19] : memref<36x768xbf16, #tpu.memory_space<vmem>>, vector<4x768xbf16>
    tpu.vector_store %arg5[%c20_18, %c0_19], %16 {strides = array<i32>} : memref<36x768xbf16, #tpu.memory_space<vmem>>, vector<4x768xbf16>,
    %c0_20 = arith.constant 0 : index
    %c0_21 = arith.constant 0 : index
    %c36 = arith.constant 36 : index
    %18 = vector.load %arg1[%c0_20, %c0_21, %c36] : memref<1x4x896xbf16, #tpu.memory_space<vmem>>, vector<1x4x768xbf16>
    %19 = vector.shape_cast %18 : vector<1x4x768xbf16> to vector<4x768xbf16>
    %c24 = arith.constant 24 : index
    %c0_22 = arith.constant 0 : index
    %20 = vector.load %arg5[%c24, %c0_22] : memref<36x768xbf16, #tpu.memory_space<vmem>>, vector<4x768xbf16>
    tpu.vector_store %arg5[%c24, %c0_22], %19 {strides = array<i32>} : memref<36x768xbf16, #tpu.memory_space<vmem>>, vector<4x768xbf16>,
    %c0_23 = arith.constant 0 : index
    %c0_24 = arith.constant 0 : index
    %c37 = arith.constant 37 : index
    %21 = vector.load %arg1[%c0_23, %c0_24, %c37] : memref<1x4x896xbf16, #tpu.memory_space<vmem>>, vector<1x4x768xbf16>
    %22 = vector.shape_cast %21 : vector<1x4x768xbf16> to vector<4x768xbf16>
    %c28 = arith.constant 28 : index
    %c0_25 = arith.constant 0 : index
    %23 = vector.load %arg5[%c28, %c0_25] : memref<36x768xbf16, #tpu.memory_space<vmem>>, vector<4x768xbf16>
    tpu.vector_store %arg5[%c28, %c0_25], %22 {strides = array<i32>} : memref<36x768xbf16, #tpu.memory_space<vmem>>, vector<4x768xbf16>,
    %c0_26 = arith.constant 0 : index
    %c0_27 = arith.constant 0 : index
    %c38 = arith.constant 38 : index
    %24 = vector.load %arg1[%c0_26, %c0_27, %c38] : memref<1x4x896xbf16, #tpu.memory_space<vmem>>, vector<1x4x768xbf16>
    %25 = vector.shape_cast %24 : vector<1x4x768xbf16> to vector<4x768xbf16>
    %c32 = arith.constant 32 : index
    %c0_28 = arith.constant 0 : index
    %26 = vector.load %arg5[%c32, %c0_28] : memref<36x768xbf16, #tpu.memory_space<vmem>>, vector<4x768xbf16>
    tpu.vector_store %arg5[%c32, %c0_28], %25 {strides = array<i32>} : memref<36x768xbf16, #tpu.memory_space<vmem>>, vector<4x768xbf16>,
    %c0_29 = arith.constant 0 : index
    %c0_30 = arith.constant 0 : index
    %27 = vector.load %arg2[%c0_29, %c0_30] : memref<32x36xbf16, #tpu.memory_space<vmem>>, vector<32x36xbf16>
    %c0_31 = arith.constant 0 : index
    %c0_32 = arith.constant 0 : index
    %28 = vector.load %arg5[%c0_31, %c0_32] : memref<36x768xbf16, #tpu.memory_space<vmem>>, vector<36x768xbf16>
    %cst = arith.constant dense<0.000000e+00> : vector<32x768xf32>
    %29 = tpu.matmul %27, %28, %cst {dimension_numbers = #tpu.dot_dimension_numbers<[1], [0], [0], [1], [0, 0, 1, 1], [], []>} : vector<32x36xbf16>, vector<36x768xbf16>, vector<32x768xf32> -> vector<32x768xf32>
    %c0_33 = arith.constant 0 : index
    %c0_34 = arith.constant 0 : index
    %30 = vector.load %arg3[%c0_33, %c0_34] : memref<32x1xf32, #tpu.memory_space<vmem>>, vector<32x1xf32>
    %31 = vector.broadcast %30 : vector<32x1xf32> to vector<32x768xf32>
    %32 = arith.addf %29, %31 : vector<32x768xf32>
    %cst_35 = arith.constant 0.000000e+00 : f32
    %33 = vector.broadcast %cst_35 : f32 to vector<32x768xf32>
    %34 = arith.maximumf %32, %33 : vector<32x768xf32>
    %35 = arith.truncf %34 : vector<32x768xf32> to vector<32x768xbf16>
    %c0_36 = arith.constant 0 : index
    %c0_37 = arith.constant 0 : index
    %36 = vector.load %arg4[%c0_36, %c0_37] : memref<32x768xbf16, #tpu.memory_space<vmem>>, vector<32x768xbf16>
    tpu.vector_store %arg4[%c0_36, %c0_37], %35 {strides = array<i32>} : memref<32x768xbf16, #tpu.memory_space<vmem>>, vector<32x768xbf16>,
    return
  }
  func.func @transform_0(%arg0: i32) -> (i32, i32, i32) {
    %c0_i32 = arith.constant 0 : i32
    %c0_i32_0 = arith.constant 0 : i32
    %c0_i32_1 = arith.constant 0 : i32
    return %arg0, %c0_i32, %c0_i32_0 : i32, i32, i32
  }
  func.func @transform_1(%arg0: i32) -> (i32, i32) {
    %c0_i32 = arith.constant 0 : i32
    %c0_i32_0 = arith.constant 0 : i32
    %c0_i32_1 = arith.constant 0 : i32
    return %c0_i32, %c0_i32_0 : i32, i32
  }
  func.func @transform_2(%arg0: i32) -> (i32, i32) {
    %c0_i32 = arith.constant 0 : i32
    %c0_i32_0 = arith.constant 0 : i32
    %c0_i32_1 = arith.constant 0 : i32
    return %c0_i32, %c0_i32_0 : i32, i32
  }
  func.func @transform_3(%arg0: i32) -> (i32, i32) {
    %c0_i32 = arith.constant 0 : i32
    %c0_i32_0 = arith.constant 0 : i32
    return %c0_i32, %arg0 : i32, i32
  }
}

</mosaic_0001>

<llo_original>
// kernel: _lambda_.1
$region0: #{_lambda_.1}
  #allocation0 [shape = 'u32[]', space=smem, size = 0x4, offset = 0x4, fixed_abs, tag = 'smem constant byte address 0x4 - core index']
  #allocation1 [shape = 'u32[72,128]{1,0:T(1,128)}', space=vmem, size = 0x9000, scoped, tag = 'internal scratch']
  #allocation2 [shape = 'bf16[36,768]{1,0:T(8,128)(2,1)}', space=vmem, size = 0xf000, scoped, tag = 'scratch operand']
  %s0 = inlined_call_operand.vmem [shape: bf16[1,4,896], index: 0, kind: input, shape index: {}]
  %s1 = inlined_call_operand.vmem [shape: bf16[32,36], index: 1, kind: input, shape index: {}]
  %s2 = inlined_call_operand.vmem [shape: f32[32,1], index: 2, kind: input, shape index: {}]
  %s3 = inlined_call_operand.vmem [shape: bf16[32,768], index: 3, kind: output, shape index: {}]
  %s4 = sld [smem:[#allocation0]]
  $region22: #{_lambda_.1} parent=0
    _
  %s6 = ssub.s32 1, %s4
  %s7 = scalar_select 0, %s6, %s4
  // Predicated region
  $region2: #{_lambda_.1} parent=0 // pred_check
    _
  $region3: #{_lambda_.1} parent=0 // pred_check_branch
    %9 = sbr.rel (0) target = $region5
  $region4: #{_lambda_.1} parent=0 // pred_region
    _
  $region5: #{_lambda_.1} parent=0 // pred_fallthru
    _
  // Predicated region
  $region6: #{_lambda_.1} parent=0 // pred_check
    _
  $region7: #{_lambda_.1} parent=0 // pred_check_branch
    %11 = sbr.rel (0) target = $region9
  $region8: #{_lambda_.1} parent=0 // pred_region
    _
  $region9: #{_lambda_.1} parent=0 // pred_fallthru
    _
  // Predicated region
  $region10: #{_lambda_.1} parent=0 // pred_check
    _
  $region11: #{_lambda_.1} parent=0 // pred_check_branch
    %13 = sbr.rel (0) target = $region13
  $region12: #{_lambda_.1} parent=0 // pred_region
    _
  $region13: #{_lambda_.1} parent=0 // pred_fallthru
    _
  %v15 = vld [vmem:[%s0] sm:$0xff]
  %v16 = vld [vmem:[%s0 + $0x8] sm:$0xf]
  %18 = vst [vmem:[#allocation1] ss:$2 sm:$0xff] %v15
  %s20 = scalar_lea.vmem [#allocation1], 16
  %21 = vst [vmem:[%s20] ss:$2 sm:$0xff] %v16
  %v22 = vld.sshfl [vmem:[#allocation1] sm:$0xff pattern:$0x75643120]
  %v23 = vld.sshfl [vmem:[#allocation1 + $0x8] sm:$0xff pattern:$0x75643120]
  %v24 = vld.sshfl [vmem:[#allocation1 + $0x10] sm:$0xff pattern:$0x75643120]
  %28 = vst [vmem:[#allocation2] sm:$0x33] %v22
  %29 = vst [vmem:[#allocation2 + $0x8] sm:$0x33] %v23
  %30 = vst [vmem:[#allocation2 + $0x10] sm:$0x33] %v24
  %v31 = vld [vmem:[%s0] sm:$0xff]
  %v32 = vld [vmem:[%s0 + $0x8] sm:$0x3f]
  %s34 = scalar_lea.vmem [#allocation1], 1
  %35 = vst [vmem:[%s34] ss:$2 sm:$0xff] %v31
  %s37 = scalar_lea.vmem [#allocation1], 17
  %38 = vst [vmem:[%s37] ss:$2 sm:$0xff] %v32
  %v39 = vld.sshfl [vmem:[#allocation1] sm:$0xff pattern:$0x75643120]
  %v41 = vld.sshfl [vmem:[#allocation1 + $0x8] sm:$0xff pattern:$0x75643120]
  %v43 = vld.sshfl [vmem:[#allocation1 + $0x10] sm:$0xff pattern:$0x75643120]
  %v45 = vld.sshfl [vmem:[#allocation1 + $0x18] sm:$0xff pattern:$0x75643120]
  %47 = vrot.lane.b32.xlu0 %v39, 127
  %v48 = vpop.permute.xlu0 %47
  %49 = vrot.lane.b32.xlu0 %v41, 127
  %v50 = vpop.permute.xlu0 %49
  %51 = vrot.lane.b32.xlu0 %v43, 127
  %v52 = vpop.permute.xlu0 %51
  %53 = vrot.lane.b32.xlu0 %v45, 127
  %v54 = vpop.permute.xlu0 %53
  %v55 = vrot.slane %v48, 4
  %v56 = vrot.slane %v50, 4
  %v57 = vrot.slane %v52, 4
  %v58 = vrot.slane %v54, 4
  %vm59 = vcmask 1043456
  %v60 = vsel %vm59, %v55, %v56
  %vm61 = vcmask 1039360
  %v62 = vsel %vm61, %v48, %v60
  %v63 = vsel %vm59, %v56, %v57
  %v64 = vsel %vm61, %v50, %v63
  %v65 = vsel %vm59, %v57, %v58
  %v66 = vsel %vm61, %v52, %v65
  %70 = vst [vmem:[#allocation2] sm:$0xcc] %v62
  %71 = vst [vmem:[#allocation2 + $0x8] sm:$0xcc] %v64
  %72 = vst [vmem:[#allocation2 + $0x10] sm:$0xcc] %v66
  %v73 = vld [vmem:[%s0] sm:$0xff]
  %v74 = vld [vmem:[%s0 + $0x8] sm:$0x3f]
  %76 = vst [vmem:[#allocation1] ss:$2 sm:$0xff] %v73
  %s78 = scalar_lea.vmem [#allocation1], 16
  %79 = vst [vmem:[%s78] ss:$2 sm:$0xff] %v74
  %v80 = vld.sshfl [vmem:[#allocation1] sm:$0xff pattern:$0x75643120]
  %v82 = vld.sshfl [vmem:[#allocation1 + $0x8] sm:$0xff pattern:$0x75643120]
  %v84 = vld.sshfl [vmem:[#allocation1 + $0x10] sm:$0xff pattern:$0x75643120]
  %v86 = vld.sshfl [vmem:[#allocation1 + $0x18] sm:$0xff pattern:$0x75643120]
  %88 = vrot.lane.b32.xlu0 %v80, 126
  %v89 = vpop.permute.xlu0 %88
  %90 = vrot.lane.b32.xlu0 %v82, 126
  %v91 = vpop.permute.xlu0 %90
  %92 = vrot.lane.b32.xlu0 %v84, 126
  %v93 = vpop.permute.xlu0 %92
  %94 = vrot.lane.b32.xlu0 %v86, 126
  %v95 = vpop.permute.xlu0 %94
  %v96 = vrot.slane %v89, 4
  %v97 = vrot.slane %v91, 4
  %v98 = vrot.slane %v93, 4
  %v99 = vrot.slane %v95, 4
  %v100 = vsel %vm59, %v96, %v97
  %vm101 = vcmask 1031168
  %v102 = vsel %vm101, %v89, %v100
  %v103 = vsel %vm59, %v97, %v98
  %v104 = vsel %vm101, %v91, %v103
  %v105 = vsel %vm59, %v98, %v99
  %v106 = vsel %vm101, %v93, %v105
  %110 = vst [vmem:[#allocation2 + $0x18] sm:$0x33] %v102
  %111 = vst [vmem:[#allocation2 + $0x20] sm:$0x33] %v104
  %112 = vst [vmem:[#allocation2 + $0x28] sm:$0x33] %v106
  %v113 = vld [vmem:[%s0] sm:$0xff]
  %v114 = vld [vmem:[%s0 + $0x8] sm:$0x3f]
  %s116 = scalar_lea.vmem [#allocation1], 1
  %117 = vst [vmem:[%s116] ss:$2 sm:$0xff] %v113
  %s119 = scalar_lea.vmem [#allocation1], 17
  %120 = vst [vmem:[%s119] ss:$2 sm:$0xff] %v114
  %v121 = vld.sshfl [vmem:[#allocation1] sm:$0xff pattern:$0x75643120]
  %v123 = vld.sshfl [vmem:[#allocation1 + $0x8] sm:$0xff pattern:$0x75643120]
  %v125 = vld.sshfl [vmem:[#allocation1 + $0x10] sm:$0xff pattern:$0x75643120]
  %v127 = vld.sshfl [vmem:[#allocation1 + $0x18] sm:$0xff pattern:$0x75643120]
  %129 = vrot.lane.b32.xlu0 %v121, 110
  %v130 = vpop.permute.xlu0 %129
  %131 = vrot.lane.b32.xlu0 %v123, 110
  %v132 = vpop.permute.xlu0 %131
  %133 = vrot.lane.b32.xlu0 %v125, 110
  %v134 = vpop.permute.xlu0 %133
  %135 = vrot.lane.b32.xlu0 %v127, 110
  %v136 = vpop.permute.xlu0 %135
  %v137 = vrot.slane %v130, 4
  %v138 = vrot.slane %v132, 4
  %v139 = vrot.slane %v134, 4
  %v140 = vrot.slane %v136, 4
  %v141 = vsel %vm59, %v137, %v138
  %vm142 = vcmask 900096
  %v143 = vsel %vm142, %v130, %v141
  %v144 = vsel %vm59, %v138, %v139
  %v145 = vsel %vm142, %v132, %v144
  %v146 = vsel %vm59, %v139, %v140
  %v147 = vsel %vm142, %v134, %v146
  %151 = vst [vmem:[#allocation2 + $0x18] sm:$0xcc] %v143
  %152 = vst [vmem:[#allocation2 + $0x20] sm:$0xcc] %v145
  %153 = vst [vmem:[#allocation2 + $0x28] sm:$0xcc] %v147
  %v154 = vld [vmem:[%s0] sm:$0xff]
  %v155 = vld [vmem:[%s0 + $0x8] sm:$0x3f]
  %157 = vst [vmem:[#allocation1] ss:$2 sm:$0xff] %v154
  %s159 = scalar_lea.vmem [#allocation1], 16
  %160 = vst [vmem:[%s159] ss:$2 sm:$0xff] %v155
  %v161 = vld.sshfl [vmem:[#allocation1] sm:$0xff pattern:$0x75643120]
  %v163 = vld.sshfl [vmem:[#allocation1 + $0x8] sm:$0xff pattern:$0x75643120]
  %v165 = vld.sshfl [vmem:[#allocation1 + $0x10] sm:$0xff pattern:$0x75643120]
  %v167 = vld.sshfl [vmem:[#allocation1 + $0x18] sm:$0xff pattern:$0x75643120]
  %169 = vrot.lane.b32.xlu0 %v161, 109
  %v170 = vpop.permute.xlu0 %169
  %171 = vrot.lane.b32.xlu0 %v163, 109
  %v172 = vpop.permute.xlu0 %171
  %173 = vrot.lane.b32.xlu0 %v165, 109
  %v174 = vpop.permute.xlu0 %173
  %175 = vrot.lane.b32.xlu0 %v167, 109
  %v176 = vpop.permute.xlu0 %175
  %v177 = vrot.slane %v170, 4
  %v178 = vrot.slane %v172, 4
  %v179 = vrot.slane %v174, 4
  %v180 = vrot.slane %v176, 4
  %v181 = vsel %vm59, %v177, %v178
  %vm182 = vcmask 891904
  %v183 = vsel %vm182, %v170, %v181
  %v184 = vsel %vm59, %v178, %v179
  %v185 = vsel %vm182, %v172, %v184
  %v186 = vsel %vm59, %v179, %v180
  %v187 = vsel %vm182, %v174, %v186
  %191 = vst [vmem:[#allocation2 + $0x30] sm:$0x33] %v183
  %192 = vst [vmem:[#allocation2 + $0x38] sm:$0x33] %v185
  %193 = vst [vmem:[#allocation2 + $0x40] sm:$0x33] %v187
  %v194 = vld [vmem:[%s0] sm:$0xff]
  %v195 = vld [vmem:[%s0 + $0x8] sm:$0x3f]
  %s197 = scalar_lea.vmem [#allocation1], 1
  %198 = vst [vmem:[%s197] ss:$2 sm:$0xff] %v194
  %s200 = scalar_lea.vmem [#allocation1], 17
  %201 = vst [vmem:[%s200] ss:$2 sm:$0xff] %v195
  %v202 = vld.sshfl [vmem:[#allocation1] sm:$0xff pattern:$0x75643120]
  %v204 = vld.sshfl [vmem:[#allocation1 + $0x8] sm:$0xff pattern:$0x75643120]
  %v206 = vld.sshfl [vmem:[#allocation1 + $0x10] sm:$0xff pattern:$0x75643120]
  %v208 = vld.sshfl [vmem:[#allocation1 + $0x18] sm:$0xff pattern:$0x75643120]
  %210 = vrot.lane.b32.xlu0 %v202, 108
  %v211 = vpop.permute.xlu0 %210
  %212 = vrot.lane.b32.xlu0 %v204, 108
  %v213 = vpop.permute.xlu0 %212
  %214 = vrot.lane.b32.xlu0 %v206, 108
  %v215 = vpop.permute.xlu0 %214
  %216 = vrot.lane.b32.xlu0 %v208, 108
  %v217 = vpop.permute.xlu0 %216
  %v218 = vrot.slane %v211, 4
  %v219 = vrot.slane %v213, 4
  %v220 = vrot.slane %v215, 4
  %v221 = vrot.slane %v217, 4
  %v222 = vsel %vm59, %v218, %v219
  %vm223 = vcmask 883712
  %v224 = vsel %vm223, %v211, %v222
  %v225 = vsel %vm59, %v219, %v220
  %v226 = vsel %vm223, %v213, %v225
  %v227 = vsel %vm59, %v220, %v221
  %v228 = vsel %vm223, %v215, %v227
  %232 = vst [vmem:[#allocation2 + $0x30] sm:$0xcc] %v224
  %233 = vst [vmem:[#allocation2 + $0x38] sm:$0xcc] %v226
  %234 = vst [vmem:[#allocation2 + $0x40] sm:$0xcc] %v228
  %v235 = vld [vmem:[%s0] sm:$0xff]
  %v236 = vld [vmem:[%s0 + $0x8] sm:$0x3f]
  %238 = vst [vmem:[#allocation1] ss:$2 sm:$0xff] %v235
  %s240 = scalar_lea.vmem [#allocation1], 16
  %241 = vst [vmem:[%s240] ss:$2 sm:$0xff] %v236
  %v242 = vld.sshfl [vmem:[#allocation1] sm:$0xff pattern:$0x75643120]
  %v244 = vld.sshfl [vmem:[#allocation1 + $0x8] sm:$0xff pattern:$0x75643120]
  %v246 = vld.sshfl [vmem:[#allocation1 + $0x10] sm:$0xff pattern:$0x75643120]
  %v248 = vld.sshfl [vmem:[#allocation1 + $0x18] sm:$0xff pattern:$0x75643120]
  %250 = vrot.lane.b32.xlu0 %v242, 92
  %v251 = vpop.permute.xlu0 %250
  %252 = vrot.lane.b32.xlu0 %v244, 92
  %v253 = vpop.permute.xlu0 %252
  %254 = vrot.lane.b32.xlu0 %v246, 92
  %v255 = vpop.permute.xlu0 %254
  %256 = vrot.lane.b32.xlu0 %v248, 92
  %v257 = vpop.permute.xlu0 %256
  %v258 = vrot.slane %v251, 4
  %v259 = vrot.slane %v253, 4
  %v260 = vrot.slane %v255, 4
  %v261 = vrot.slane %v257, 4
  %v262 = vsel %vm59, %v258, %v259
  %vm263 = vcmask 752640
  %v264 = vsel %vm263, %v251, %v262
  %v265 = vsel %vm59, %v259, %v260
  %v266 = vsel %vm263, %v253, %v265
  %v267 = vsel %vm59, %v260, %v261
  %v268 = vsel %vm263, %v255, %v267
  %272 = vst [vmem:[#allocation2 + $0x48] sm:$0x33] %v264
  %273 = vst [vmem:[#allocation2 + $0x50] sm:$0x33] %v266
  %274 = vst [vmem:[#allocation2 + $0x58] sm:$0x33] %v268
  %v275 = vld [vmem:[%s0] sm:$0xff]
  %v276 = vld [vmem:[%s0 + $0x8] sm:$0x3f]
  %s278 = scalar_lea.vmem [#allocation1], 1
  %279 = vst [vmem:[%s278] ss:$2 sm:$0xff] %v275
  %s281 = scalar_lea.vmem [#allocation1], 17
  %282 = vst [vmem:[%s281] ss:$2 sm:$0xff] %v276
  %v283 = vld.sshfl [vmem:[#allocation1] sm:$0xff pattern:$0x75643120]
  %v285 = vld.sshfl [vmem:[#allocation1 + $0x8] sm:$0xff pattern:$0x75643120]
  %v287 = vld.sshfl [vmem:[#allocation1 + $0x10] sm:$0xff pattern:$0x75643120]
  %v289 = vld.sshfl [vmem:[#allocation1 + $0x18] sm:$0xff pattern:$0x75643120]
  %291 = vrot.lane.b32.xlu0 %v283, 91
  %v292 = vpop.permute.xlu0 %291
  %293 = vrot.lane.b32.xlu0 %v285, 91
  %v294 = vpop.permute.xlu0 %293
  %295 = vrot.lane.b32.xlu0 %v287, 91
  %v296 = vpop.permute.xlu0 %295
  %297 = vrot.lane.b32.xlu0 %v289, 91
  %v298 = vpop.permute.xlu0 %297
  %v299 = vrot.slane %v292, 4
  %v300 = vrot.slane %v294, 4
  %v301 = vrot.slane %v296, 4
  %v302 = vrot.slane %v298, 4
  %v303 = vsel %vm59, %v299, %v300
  %vm304 = vcmask 744448
  %v305 = vsel %vm304, %v292, %v303
  %v306 = vsel %vm59, %v300, %v301
  %v307 = vsel %vm304, %v294, %v306
  %v308 = vsel %vm59, %v301, %v302
  %v309 = vsel %vm304, %v296, %v308
  %313 = vst [vmem:[#allocation2 + $0x48] sm:$0xcc] %v305
  %314 = vst [vmem:[#allocation2 + $0x50] sm:$0xcc] %v307
  %315 = vst [vmem:[#allocation2 + $0x58] sm:$0xcc] %v309
  %v316 = vld [vmem:[%s0] sm:$0xff]
  %v317 = vld [vmem:[%s0 + $0x8] sm:$0x3f]
  %319 = vst [vmem:[#allocation1] ss:$2 sm:$0xff] %v316
  %s321 = scalar_lea.vmem [#allocation1], 16
  %322 = vst [vmem:[%s321] ss:$2 sm:$0xff] %v317
  %v323 = vld.sshfl [vmem:[#allocation1] sm:$0xff pattern:$0x75643120]
  %v325 = vld.sshfl [vmem:[#allocation1 + $0x8] sm:$0xff pattern:$0x75643120]
  %v327 = vld.sshfl [vmem:[#allocation1 + $0x10] sm:$0xff pattern:$0x75643120]
  %v329 = vld.sshfl [vmem:[#allocation1 + $0x18] sm:$0xff pattern:$0x75643120]
  %331 = vrot.lane.b32.xlu0 %v323, 90
  %v332 = vpop.permute.xlu0 %331
  %333 = vrot.lane.b32.xlu0 %v325, 90
  %v334 = vpop.permute.xlu0 %333
  %335 = vrot.lane.b32.xlu0 %v327, 90
  %v336 = vpop.permute.xlu0 %335
  %337 = vrot.lane.b32.xlu0 %v329, 90
  %v338 = vpop.permute.xlu0 %337
  %v339 = vrot.slane %v332, 4
  %v340 = vrot.slane %v334, 4
  %v341 = vrot.slane %v336, 4
  %v342 = vrot.slane %v338, 4
  %v343 = vsel %vm59, %v339, %v340
  %vm344 = vcmask 736256
  %v345 = vsel %vm344, %v332, %v343
  %v346 = vsel %vm59, %v340, %v341
  %v347 = vsel %vm344, %v334, %v346
  %v348 = vsel %vm59, %v341, %v342
  %v349 = vsel %vm344, %v336, %v348
  %353 = vst [vmem:[#allocation2 + $0x60] sm:$0x33] %v345
  %354 = vst [vmem:[#allocation2 + $0x68] sm:$0x33] %v347
  %355 = vst [vmem:[#allocation2 + $0x70] sm:$0x33] %v349
  %v356 = vld [vmem:[%s1] sm:$0xf]
  %v357 = vld [vmem:[%s1 + $0x4] sm:$0xf]
  %v358 = vld [vmem:[%s1 + $0x8] sm:$0xf]
  %v359 = vld [vmem:[%s1 + $0xc] sm:$0xf]
  %v360 = vld [vmem:[#allocation2] sm:$0xff]
  %v361 = vld [vmem:[#allocation2 + $0x8] sm:$0xff]
  %v362 = vld [vmem:[#allocation2 + $0x10] sm:$0xff]
  %v363 = vld [vmem:[#allocation2 + $0x18] sm:$0xff]
  %v364 = vld [vmem:[#allocation2 + $0x20] sm:$0xff]
  %v365 = vld [vmem:[#allocation2 + $0x28] sm:$0xff]
  %v366 = vld [vmem:[#allocation2 + $0x30] sm:$0xff]
  %v367 = vld [vmem:[#allocation2 + $0x38] sm:$0xff]
  %v368 = vld [vmem:[#allocation2 + $0x40] sm:$0xff]
  %v369 = vld [vmem:[#allocation2 + $0x48] sm:$0xff]
  %v370 = vld [vmem:[#allocation2 + $0x50] sm:$0xff]
  %v371 = vld [vmem:[#allocation2 + $0x58] sm:$0xff]
  %v372 = vld [vmem:[#allocation2 + $0x60] sm:$0x33]
  %v373 = vld [vmem:[#allocation2 + $0x68] sm:$0x33]
  %v374 = vld [vmem:[#allocation2 + $0x70] sm:$0x33]
  %v375 = vld [vmem:[%s2] sm:$0xff]
  %v376 = vld [vmem:[%s2 + $0x8] sm:$0xff]
  %v377 = vld [vmem:[%s2 + $0x10] sm:$0xff]
  %v378 = vld [vmem:[%s2 + $0x18] sm:$0xff]
  %380 = vset.pattern.permute.xlu0 0
  %381 = vperm.xlu0 %380, %v375
  %v382 = vpop.permute.xlu0 %381
  %385 = vset.pattern.permute.xlu0 0
  %386 = vperm.xlu0 %385, %v376
  %v387 = vpop.permute.xlu0 %386
  %390 = vset.pattern.permute.xlu0 0
  %391 = vperm.xlu0 %390, %v377
  %v392 = vpop.permute.xlu0 %391
  %395 = vset.pattern.permute.xlu0 0
  %396 = vperm.xlu0 %395, %v378
  %v397 = vpop.permute.xlu0 %396
  %v403 = vunpack.c.l.b16 %v356
  %v404 = vunpack.c.l.b16 %v357
  %v405 = vunpack.c.l.b16 %v358
  %v406 = vunpack.c.l.b16 %v359
  %v407 = vpack.c.b16 %v404, %v403
  %v408 = vpack.c.b16 %v406, %v405
  %v424 = vunpack.c.l.b16 %v360
  %v425 = vunpack.c.h.b16 %v360
  %v426 = vunpack.c.l.b16 %v361
  %v427 = vunpack.c.h.b16 %v361
  %v428 = vunpack.c.l.b16 %v362
  %v429 = vunpack.c.h.b16 %v362
  %v430 = vunpack.c.l.b16 %v363
  %v431 = vunpack.c.h.b16 %v363
  %v432 = vunpack.c.l.b16 %v364
  %v433 = vunpack.c.h.b16 %v364
  %v434 = vunpack.c.l.b16 %v365
  %v435 = vunpack.c.h.b16 %v365
  %v436 = vunpack.c.l.b16 %v366
  %v437 = vunpack.c.h.b16 %v366
  %v438 = vunpack.c.l.b16 %v367
  %v439 = vunpack.c.h.b16 %v367
  %v440 = vunpack.c.l.b16 %v368
  %v441 = vunpack.c.h.b16 %v368
  %v442 = vunpack.c.l.b16 %v369
  %v443 = vunpack.c.h.b16 %v369
  %v444 = vunpack.c.l.b16 %v370
  %v445 = vunpack.c.h.b16 %v370
  %v446 = vunpack.c.l.b16 %v371
  %v447 = vunpack.c.h.b16 %v371
  %v448 = vunpack.c.l.b16 %v372
  %v449 = vunpack.c.h.b16 %v372
  %v450 = vunpack.c.l.b16 %v373
  %v451 = vunpack.c.h.b16 %v373
  %v452 = vunpack.c.l.b16 %v374
  %v453 = vunpack.c.h.b16 %v374
  %v454 = vpack.c.b16 %v430, %v424
  %v455 = vpack.c.b16 %v431, %v425
  %v456 = vpack.c.b16 %v432, %v426
  %v457 = vpack.c.b16 %v433, %v427
  %v458 = vpack.c.b16 %v434, %v428
  %v459 = vpack.c.b16 %v435, %v429
  %v460 = vpack.c.b16 %v442, %v436
  %v461 = vpack.c.b16 %v443, %v437
  %v462 = vpack.c.b16 %v444, %v438
  %v463 = vpack.c.b16 %v445, %v439
  %v464 = vpack.c.b16 %v446, %v440
  %v465 = vpack.c.b16 %v447, %v441
  %v466 = vpack.c.b16 %v448, %v448
  %v467 = vpack.c.b16 %v449, %v449
  %v468 = vpack.c.b16 %v450, %v450
  %v469 = vpack.c.b16 %v451, %v451
  %v470 = vpack.c.b16 %v452, %v452
  %v471 = vpack.c.b16 %v453, %v453
  %vm484 = vcmask 293888
  %v486 = vsel %vm484, %v407, 0
  %v489 = vsel %vm484, %v408, 0
  %vm491 = vcmask 1041408
  %v493 = vsel %vm491, %v466, 0
  %v496 = vsel %vm491, %v467, 0
  %v499 = vsel %vm491, %v468, 0
  %v502 = vsel %vm491, %v469, 0
  %v505 = vsel %vm491, %v470, 0
  %v508 = vsel %vm491, %v471, 0
  %510 = vmatpush.bf16.msra.mxu0 0
  %511 = vmatpush.bf16.msra.mxu0 0
  %512 = vmatpush.bf16.msra.mxu0 0
  %513 = vmatpush.bf16.msra.mxu0 0
  %514 = vmatpush.bf16.msra.mxu0 0
  %515 = vmatpush.bf16.msra.mxu0 %v493
  %516 = vmatpush.bf16.msra.mxu0 %v460
  %517 = vmatpush.bf16.msra.mxu0 %v454
  %518 = vmatmul.bf16.gmra.mxu0 %v486
  %v519 = vpop.f32.mrf.mxu0
  %v520 = vadd.f32 %v382, %v519
  %v521 = vpop.f32.mrf.mxu0
  %v522 = vadd.f32 %v387, %v521
  %523 = vmatmul.bf16.gmra.mxu0 %v489
  %v524 = vpop.f32.mrf.mxu0
  %v525 = vadd.f32 %v392, %v524
  %v526 = vpop.f32.mrf.mxu0
  %v527 = vadd.f32 %v397, %v526
  %528 = vdwg.mxu0
  %529 = vmatpush.bf16.msra.mxu0 0
  %530 = vmatpush.bf16.msra.mxu0 0
  %531 = vmatpush.bf16.msra.mxu0 0
  %532 = vmatpush.bf16.msra.mxu0 0
  %533 = vmatpush.bf16.msra.mxu0 0
  %534 = vmatpush.bf16.msra.mxu0 %v496
  %535 = vmatpush.bf16.msra.mxu0 %v461
  %536 = vmatpush.bf16.msra.mxu0 %v455
  %537 = vmatmul.bf16.gmra.mxu0 %v486
  %v538 = vpop.f32.mrf.mxu0
  %v539 = vadd.f32 %v382, %v538
  %v540 = vpop.f32.mrf.mxu0
  %v541 = vadd.f32 %v387, %v540
  %542 = vmatmul.bf16.gmra.mxu0 %v489
  %v543 = vpop.f32.mrf.mxu0
  %v544 = vadd.f32 %v392, %v543
  %v545 = vpop.f32.mrf.mxu0
  %v546 = vadd.f32 %v397, %v545
  %547 = vdwg.mxu0
  %548 = vmatpush.bf16.msra.mxu0 0
  %549 = vmatpush.bf16.msra.mxu0 0
  %550 = vmatpush.bf16.msra.mxu0 0
  %551 = vmatpush.bf16.msra.mxu0 0
  %552 = vmatpush.bf16.msra.mxu0 0
  %553 = vmatpush.bf16.msra.mxu0 %v499
  %554 = vmatpush.bf16.msra.mxu0 %v462
  %555 = vmatpush.bf16.msra.mxu0 %v456
  %556 = vmatmul.bf16.gmra.mxu0 %v486
  %v557 = vpop.f32.mrf.mxu0
  %v558 = vadd.f32 %v382, %v557
  %v559 = vpop.f32.mrf.mxu0
  %v560 = vadd.f32 %v387, %v559
  %561 = vmatmul.bf16.gmra.mxu0 %v489
  %v562 = vpop.f32.mrf.mxu0
  %v563 = vadd.f32 %v392, %v562
  %v564 = vpop.f32.mrf.mxu0
  %v565 = vadd.f32 %v397, %v564
  %566 = vdwg.mxu0
  %567 = vmatpush.bf16.msra.mxu0 0
  %568 = vmatpush.bf16.msra.mxu0 0
  %569 = vmatpush.bf16.msra.mxu0 0
  %570 = vmatpush.bf16.msra.mxu0 0
  %571 = vmatpush.bf16.msra.mxu0 0
  %572 = vmatpush.bf16.msra.mxu0 %v502
  %573 = vmatpush.bf16.msra.mxu0 %v463
  %574 = vmatpush.bf16.msra.mxu0 %v457
  %575 = vmatmul.bf16.gmra.mxu0 %v486
  %v576 = vpop.f32.mrf.mxu0
  %v577 = vadd.f32 %v382, %v576
  %v578 = vpop.f32.mrf.mxu0
  %v579 = vadd.f32 %v387, %v578
  %580 = vmatmul.bf16.gmra.mxu0 %v489
  %v581 = vpop.f32.mrf.mxu0
  %v582 = vadd.f32 %v392, %v581
  %v583 = vpop.f32.mrf.mxu0
  %v584 = vadd.f32 %v397, %v583
  %585 = vdwg.mxu0
  %586 = vmatpush.bf16.msra.mxu0 0
  %587 = vmatpush.bf16.msra.mxu0 0
  %588 = vmatpush.bf16.msra.mxu0 0
  %589 = vmatpush.bf16.msra.mxu0 0
  %590 = vmatpush.bf16.msra.mxu0 0
  %591 = vmatpush.bf16.msra.mxu0 %v505
  %592 = vmatpush.bf16.msra.mxu0 %v464
  %593 = vmatpush.bf16.msra.mxu0 %v458
  %594 = vmatmul.bf16.gmra.mxu0 %v486
  %v595 = vpop.f32.mrf.mxu0
  %v596 = vadd.f32 %v382, %v595
  %v597 = vpop.f32.mrf.mxu0
  %v598 = vadd.f32 %v387, %v597
  %599 = vmatmul.bf16.gmra.mxu0 %v489
  %v600 = vpop.f32.mrf.mxu0
  %v601 = vadd.f32 %v392, %v600
  %v602 = vpop.f32.mrf.mxu0
  %v603 = vadd.f32 %v397, %v602
  %604 = vdwg.mxu0
  %605 = vmatpush.bf16.msra.mxu0 0
  %606 = vmatpush.bf16.msra.mxu0 0
  %607 = vmatpush.bf16.msra.mxu0 0
  %608 = vmatpush.bf16.msra.mxu0 0
  %609 = vmatpush.bf16.msra.mxu0 0
  %610 = vmatpush.bf16.msra.mxu0 %v508
  %611 = vmatpush.bf16.msra.mxu0 %v465
  %612 = vmatpush.bf16.msra.mxu0 %v459
  %613 = vmatmul.bf16.gmra.mxu0 %v486
  %v614 = vpop.f32.mrf.mxu0
  %v615 = vadd.f32 %v382, %v614
  %v616 = vpop.f32.mrf.mxu0
  %v617 = vadd.f32 %v387, %v616
  %618 = vmatmul.bf16.gmra.mxu0 %v489
  %v619 = vpop.f32.mrf.mxu0
  %v620 = vadd.f32 %v392, %v619
  %v621 = vpop.f32.mrf.mxu0
  %v622 = vadd.f32 %v397, %v621
  %623 = vdwg.mxu0
  %v624 = vmax.f32 %v520, 0.0
  %v625 = vmax.f32 %v539, 0.0
  %v626 = vmax.f32 %v558, 0.0
  %v627 = vmax.f32 %v577, 0.0
  %v628 = vmax.f32 %v596, 0.0
  %v629 = vmax.f32 %v615, 0.0
  %v630 = vmax.f32 %v522, 0.0
  %v631 = vmax.f32 %v541, 0.0
  %v632 = vmax.f32 %v560, 0.0
  %v633 = vmax.f32 %v579, 0.0
  %v634 = vmax.f32 %v598, 0.0
  %v635 = vmax.f32 %v617, 0.0
  %v636 = vmax.f32 %v525, 0.0
  %v637 = vmax.f32 %v544, 0.0
  %v638 = vmax.f32 %v563, 0.0
  %v639 = vmax.f32 %v582, 0.0
  %v640 = vmax.f32 %v601, 0.0
  %v641 = vmax.f32 %v620, 0.0
  %v642 = vmax.f32 %v527, 0.0
  %v643 = vmax.f32 %v546, 0.0
  %v644 = vmax.f32 %v565, 0.0
  %v645 = vmax.f32 %v584, 0.0
  %v646 = vmax.f32 %v603, 0.0
  %v647 = vmax.f32 %v622, 0.0
  %v648 = vpack.c.bf16 %v625, %v624
  %v649 = vpack.c.bf16 %v627, %v626
  %v650 = vpack.c.bf16 %v629, %v628
  %v651 = vpack.c.bf16 %v631, %v630
  %v652 = vpack.c.bf16 %v633, %v632
  %v653 = vpack.c.bf16 %v635, %v634
  %v654 = vpack.c.bf16 %v637, %v636
  %v655 = vpack.c.bf16 %v639, %v638
  %v656 = vpack.c.bf16 %v641, %v640
  %v657 = vpack.c.bf16 %v643, %v642
  %v658 = vpack.c.bf16 %v645, %v644
  %v659 = vpack.c.bf16 %v647, %v646
  %660 = vst [vmem:[%s3] sm:$0xff] %v648
  %661 = vst [vmem:[%s3 + $0x8] sm:$0xff] %v649
  %662 = vst [vmem:[%s3 + $0x10] sm:$0xff] %v650
  %663 = vst [vmem:[%s3 + $0x18] sm:$0xff] %v651
  %664 = vst [vmem:[%s3 + $0x20] sm:$0xff] %v652
  %665 = vst [vmem:[%s3 + $0x28] sm:$0xff] %v653
  %666 = vst [vmem:[%s3 + $0x30] sm:$0xff] %v654
  %667 = vst [vmem:[%s3 + $0x38] sm:$0xff] %v655
  %668 = vst [vmem:[%s3 + $0x40] sm:$0xff] %v656
  %669 = vst [vmem:[%s3 + $0x48] sm:$0xff] %v657
  %670 = vst [vmem:[%s3 + $0x50] sm:$0xff] %v658
  %671 = vst [vmem:[%s3 + $0x58] sm:$0xff] %v659
  // Predicated region
  $region14: #{_lambda_.1} parent=0 // pred_check
    _
  $region15: #{_lambda_.1} parent=0 // pred_check_branch
    %673 = sbr.rel (0) target = $region17
  $region16: #{_lambda_.1} parent=0 // pred_region
    _
  $region17: #{_lambda_.1} parent=0 // pred_fallthru
    _
  // Predicated region
  $region18: #{_lambda_.1} parent=0 // pred_check
    _
  $region19: #{_lambda_.1} parent=0 // pred_check_branch
    %675 = sbr.rel (0) target = $region21
  $region20: #{_lambda_.1} parent=0 // pred_region
    _
  $region21: #{_lambda_.1} parent=0 // pred_fallthru
    _

</llo_original>
